<compile_context>
chip_gen: v7x
topology: tpu7x:2x2x1
jax: 0.10.0
libtpu: 0.0.40
codegen_flags: <defaults>
</compile_context>

<pallas_src>
import functools

import jax
import jax.numpy as jnp
from jax.experimental import pallas as pl
from jax.experimental.pallas import tpu as pltpu

HIDDEN = 64  # fixed by the module definition (fc1: input -> 64)


def _round_up(n, m):
    return ((n + m - 1) // m) * m


def _policy_kernel(x_ref, w1_ref, b1_ref, w2_ref, b2_ref, mu_ref):
    # fc1: (TB, I) @ (I, H) + (1, H); f32 MXU accumulation.
    h = jnp.dot(x_ref[...], w1_ref[...], preferred_element_type=jnp.float32)
    h = h + b1_ref[...]
    # leaky_relu, negative_slope = 0.01 (matches F.leaky_relu default).
    h = jnp.maximum(h, 0.01 * h)

    # fc2: (TB, H) @ (H, O) + (1, O);  mu = tanh(fc2(.) * 0.035).
    z = jnp.dot(h.astype(w2_ref.dtype), w2_ref[...],
                preferred_element_type=jnp.float32)
    z = z + b2_ref[...]
    # Un-padded (TB, O) store: masked vst costs ~TB/8 cycles per tile, far
    # cheaper than writing 128-lane padded rows back to HBM.
    mu_ref[...] = jnp.tanh(z * 0.035).astype(mu_ref.dtype)


def _choose_batch_tile(B, I, O, budget_bytes=16 << 20):
    """Batch tile: multiple of 8, <= 2048 rows, double-buffered x/mu tiles fit
    a conservative VMEM budget (safe on v5e/v6e/v7x). For B >= 16 the tile is
    also capped at ceil(B/2) rounded to 8 so the grid has >= 2 parallel steps
    and v7x's two TensorCores both get work."""
    cap = 2048
    if B >= 16:
        cap = min(cap, _round_up(pl.cdiv(B, 2), 8))
    tb = min(cap, _round_up(B, 8))
    bytes_per_row = (I + O) * 4  # weights are tiny and VMEM-resident
    while tb > 8 and 2 * tb * bytes_per_row > budget_bytes:
        tb //= 2
    return max(8, (tb // 8) * 8)


@jax.jit
def policy_forward(x, w1, b1, w2, b2, std_vec):
    """x: (B, I); w1: (I, 64); b1: (1, 64); w2: (64, O); b2: (1, O);
    std_vec: (O,) = softplus(log_std) (precomputed in prepare_params).

    Returns (mu, std), each (B, O) float32, matching PolicyNetwork.forward.
    """
    B, I = x.shape
    O = w2.shape[1]

    TB = _choose_batch_tile(B, I, O)
    grid = (pl.cdiv(B, TB),)

    mu = pl.pallas_call(
        _policy_kernel,
        out_shape=jax.ShapeDtypeStruct((B, O), jnp.float32),
        grid=grid,
        in_specs=[
            pl.BlockSpec((TB, I), lambda i: (i, 0)),        # x: batch-tiled
            pl.BlockSpec((I, HIDDEN), lambda i: (0, 0)),    # w1: VMEM-resident
            pl.BlockSpec((1, HIDDEN), lambda i: (0, 0)),    # b1
            pl.BlockSpec((HIDDEN, O), lambda i: (0, 0)),    # w2
            pl.BlockSpec((1, O), lambda i: (0, 0)),         # b2
        ],
        out_specs=pl.BlockSpec((TB, O), lambda i: (i, 0)),
        compiler_params=pltpu.CompilerParams(
            dimension_semantics=("parallel",),
        ),
    )(x.astype(w1.dtype), w1, b1, w2, b2)

    # std is batch-independent; broadcast the precomputed softplus vector.
    # (Kept as a (B, O) output to preserve the module's forward semantics.)
    std = jnp.broadcast_to(std_vec.astype(jnp.float32), (B, O))
    return mu, std


def prepare_params(w1_t, b1_t, w2_t, b2_t, log_std, dtype=jnp.float32):
    """One-time parameter preparation (hoisted out of the jitted forward).

    Inputs are in torch layout: fc1.weight (64, I), fc1.bias (64,),
    fc2.weight (O, 64), fc2.bias (O,), log_std (O,).
    Pass dtype=jnp.bfloat16 on v6e/v7x to halve weight/activation DMA bytes;
    dots still accumulate in f32 and biases / post-dot math stay f32.
    """
    assert w1_t.shape[0] == HIDDEN and w2_t.shape[1] == HIDDEN, (
        f"expected hidden size {HIDDEN}, got fc1.weight {w1_t.shape}, "
        f"fc2.weight {w2_t.shape}")
    w1 = jnp.asarray(w1_t).T.astype(dtype)                    # (I, 64)
    w2 = jnp.asarray(w2_t).T.astype(dtype)                    # (64, O)
    b1 = jnp.asarray(b1_t, jnp.float32).reshape(1, HIDDEN)    # (1, 64)
    b2 = jnp.asarray(b2_t, jnp.float32).reshape(1, -1)        # (1, O)
    std_vec = jax.nn.softplus(jnp.asarray(log_std, jnp.float32))
    return w1, b1, w2, b2, std_vec


def init_params(key, input_size, output_size):
    """Deterministic init mirroring the PyTorch module (torch layout).

    fc1.weight: (64, input_size) xavier_uniform, fc1.bias: (64,)
    fc2.weight: (output_size, 64) xavier_uniform, fc2.bias: (output_size,)
    log_std: (output_size,) filled with -1.0
    """
    k1, k2, k3, k4 = jax.random.split(key, 4)

    def xavier_uniform(k, fan_out, fan_in):
        limit = jnp.sqrt(6.0 / (fan_in + fan_out))
        return jax.random.uniform(k, (fan_out, fan_in), jnp.float32, -limit, limit)

    w1_t = xavier_uniform(k1, HIDDEN, input_size)       # (64, I)
    w2_t = xavier_uniform(k2, output_size, HIDDEN)      # (O, 64)
    bb1 = 1.0 / jnp.sqrt(jnp.float32(input_size))
    bb2 = 1.0 / jnp.sqrt(jnp.float32(HIDDEN))
    b1_t = jax.random.uniform(k3, (HIDDEN,), jnp.float32, -bb1, bb1)
    b2_t = jax.random.uniform(k4, (output_size,), jnp.float32, -bb2, bb2)
    log_std = jnp.full((output_size,), -1.0, jnp.float32)
    return w1_t, b1_t, w2_t, b2_t, log_std


def _reference(x, w1, b1, w2, b2, std_vec):
    h = x @ w1 + b1
    h = jnp.where(h > 0, h, 0.01 * h)
    mu = jnp.tanh((h @ w2 + b2) * 0.035)
    std = jnp.broadcast_to(std_vec, mu.shape)
    return mu, std


if __name__ == "__main__":
    key = jax.random.PRNGKey(0)
    input_size, output_size = 16, 4

    kx, kx2, kp = jax.random.split(key, 3)
    params = prepare_params(*init_params(kp, input_size, output_size))
    w1, b1, w2, b2, std_vec = params

    ok = True
    # Case 1: batch multiple of 8 (single tile).
    x = jax.random.normal(kx, (8, input_size), jnp.float32)
    mu, std = policy_forward(x, *params)
    jax.block_until_ready((mu, std))
    mu_ref, std_ref = _reference(x, w1, b1, w2, b2, std_vec)
    ok &= mu.shape == (8, output_size) and std.shape == (8, output_size)
    ok &= bool(jnp.allclose(mu, mu_ref, atol=1e-5))
    ok &= bool(jnp.allclose(std, std_ref, atol=1e-5))

    # Case 2: ragged batch (not a multiple of 8) - exercises the masked last tile.
    x2 = jax.random.normal(kx2, (11, input_size), jnp.float32)
    mu2, std2 = policy_forward(x2, *params)
    jax.block_until_ready((mu2, std2))
    mu2_ref, std2_ref = _reference(x2, w1, b1, w2, b2, std_vec)
    ok &= mu2.shape == (11, output_size) and std2.shape == (11, output_size)
    ok &= bool(jnp.allclose(mu2, mu2_ref, atol=1e-5))
    ok &= bool(jnp.allclose(std2, std2_ref, atol=1e-5))

    assert ok, "mismatch vs. reference"
    print("KERNEL_OK")
</pallas_src>

<mosaic_0001>
module attributes {stable_mosaic.version = 11 : i64} {
  func.func @_policy_kernel(%arg0: i32, %arg1: memref<8x16xf32, #tpu.memory_space<vmem>>, %arg2: memref<16x64xf32, #tpu.memory_space<vmem>>, %arg3: memref<1x64xf32, #tpu.memory_space<vmem>>, %arg4: memref<64x4xf32, #tpu.memory_space<vmem>>, %arg5: memref<1x4xf32, #tpu.memory_space<vmem>>, %arg6: memref<8x4xf32, #tpu.memory_space<vmem>>) attributes {dimension_semantics = [#tpu.dimension_semantics<parallel>], iteration_bounds = array<i64: 1>, scalar_prefetch = 0 : i64, scratch_operands = 0 : i64, tpu.core_type = #tpu.core_type<tc>, window_params = [{transform_indices = @transform_0, window_bounds = array<i64: 8, 16>}, {pipeline_mode = #tpu.pipeline_mode<synchronous>, transform_indices = @transform_1, window_bounds = array<i64: 16, 64>}, {pipeline_mode = #tpu.pipeline_mode<synchronous>, transform_indices = @transform_2, window_bounds = array<i64: 1, 64>}, {pipeline_mode = #tpu.pipeline_mode<synchronous>, transform_indices = @transform_3, window_bounds = array<i64: 64, 4>}, {pipeline_mode = #tpu.pipeline_mode<synchronous>, transform_indices = @transform_4, window_bounds = array<i64: 1, 4>}, {transform_indices = @transform_5, window_bounds = array<i64: 8, 4>}]} {
    %c0 = arith.constant 0 : index
    %c0_0 = arith.constant 0 : index
    %0 = vector.load %arg1[%c0, %c0_0] : memref<8x16xf32, #tpu.memory_space<vmem>>, vector<8x16xf32>
    %c0_1 = arith.constant 0 : index
    %c0_2 = arith.constant 0 : index
    %1 = vector.load %arg2[%c0_1, %c0_2] : memref<16x64xf32, #tpu.memory_space<vmem>>, vector<16x64xf32>
    %cst = arith.constant dense<0.000000e+00> : vector<8x64xf32>
    %2 = tpu.matmul %0, %1, %cst {dimension_numbers = #tpu.dot_dimension_numbers<[1], [0], [0], [1], [0, 0, 1, 1], [], []>} : vector<8x16xf32>, vector<16x64xf32>, vector<8x64xf32> -> vector<8x64xf32>
    %c0_3 = arith.constant 0 : index
    %c0_4 = arith.constant 0 : index
    %3 = vector.load %arg3[%c0_3, %c0_4] : memref<1x64xf32, #tpu.memory_space<vmem>>, vector<1x64xf32>
    %4 = vector.broadcast %3 : vector<1x64xf32> to vector<8x64xf32>
    %5 = arith.addf %2, %4 : vector<8x64xf32>
    %cst_5 = arith.constant 0.00999999977 : f32
    %6 = vector.broadcast %cst_5 : f32 to vector<8x64xf32>
    %7 = arith.mulf %6, %5 : vector<8x64xf32>
    %8 = arith.maximumf %5, %7 : vector<8x64xf32>
    %c0_6 = arith.constant 0 : index
    %c0_7 = arith.constant 0 : index
    %9 = vector.load %arg4[%c0_6, %c0_7] : memref<64x4xf32, #tpu.memory_space<vmem>>, vector<64x4xf32>
    %cst_8 = arith.constant dense<0.000000e+00> : vector<8x4xf32>
    %10 = tpu.matmul %8, %9, %cst_8 {dimension_numbers = #tpu.dot_dimension_numbers<[1], [0], [0], [1], [0, 0, 1, 1], [], []>} : vector<8x64xf32>, vector<64x4xf32>, vector<8x4xf32> -> vector<8x4xf32>
    %c0_9 = arith.constant 0 : index
    %c0_10 = arith.constant 0 : index
    %11 = vector.load %arg5[%c0_9, %c0_10] : memref<1x4xf32, #tpu.memory_space<vmem>>, vector<1x4xf32>
    %12 = vector.broadcast %11 : vector<1x4xf32> to vector<8x4xf32>
    %13 = arith.addf %10, %12 : vector<8x4xf32>
    %cst_11 = arith.constant 3.500000e-02 : f32
    %14 = vector.broadcast %cst_11 : f32 to vector<8x4xf32>
    %15 = arith.mulf %13, %14 : vector<8x4xf32>
    %16 = math.tanh %15 : vector<8x4xf32>
    %c0_12 = arith.constant 0 : index
    %c0_13 = arith.constant 0 : index
    %17 = vector.load %arg6[%c0_12, %c0_13] : memref<8x4xf32, #tpu.memory_space<vmem>>, vector<8x4xf32>
    tpu.vector_store %arg6[%c0_12, %c0_13], %16 {strides = array<i32>} : memref<8x4xf32, #tpu.memory_space<vmem>>, vector<8x4xf32>,
    return
  }
  func.func @transform_0(%arg0: i32) -> (i32, i32) {
    %c0_i32 = arith.constant 0 : i32
    %c0_i32_0 = arith.constant 0 : i32
    return %arg0, %c0_i32 : i32, i32
  }
  func.func @transform_1(%arg0: i32) -> (i32, i32) {
    %c0_i32 = arith.constant 0 : i32
    %c0_i32_0 = arith.constant 0 : i32
    %c0_i32_1 = arith.constant 0 : i32
    return %c0_i32, %c0_i32_0 : i32, i32
  }
  func.func @transform_2(%arg0: i32) -> (i32, i32) {
    %c0_i32 = arith.constant 0 : i32
    %c0_i32_0 = arith.constant 0 : i32
    %c0_i32_1 = arith.constant 0 : i32
    return %c0_i32, %c0_i32_0 : i32, i32
  }
  func.func @transform_3(%arg0: i32) -> (i32, i32) {
    %c0_i32 = arith.constant 0 : i32
    %c0_i32_0 = arith.constant 0 : i32
    %c0_i32_1 = arith.constant 0 : i32
    return %c0_i32, %c0_i32_0 : i32, i32
  }
  func.func @transform_4(%arg0: i32) -> (i32, i32) {
    %c0_i32 = arith.constant 0 : i32
    %c0_i32_0 = arith.constant 0 : i32
    %c0_i32_1 = arith.constant 0 : i32
    return %c0_i32, %c0_i32_0 : i32, i32
  }
  func.func @transform_5(%arg0: i32) -> (i32, i32) {
    %c0_i32 = arith.constant 0 : i32
    %c0_i32_0 = arith.constant 0 : i32
    return %arg0, %c0_i32 : i32, i32
  }
}

</mosaic_0001>

<llo_original>
// kernel: policy_forward.1
$region0: #{policy_forward.1}
  #allocation0 [shape = 'u32[]', space=smem, size = 0x4, offset = 0x4, fixed_abs, tag = 'smem constant byte address 0x4 - core index']
  #allocation1 [shape = 'u32[144,128]{1,0:T(1,128)}', space=vmem, size = 0x12000, scoped, tag = 'internal scratch']
  %s0 = inlined_call_operand.vmem [shape: f32[8,16], index: 0, kind: input, shape index: {}]
  %s1 = inlined_call_operand.vmem [shape: f32[16,64], index: 1, kind: input, shape index: {}]
  %s2 = inlined_call_operand.vmem [shape: f32[1,64], index: 2, kind: input, shape index: {}]
  %s3 = inlined_call_operand.vmem [shape: f32[64,4], index: 3, kind: input, shape index: {}]
  %s4 = inlined_call_operand.vmem [shape: f32[1,4], index: 4, kind: input, shape index: {}]
  %s5 = inlined_call_operand.vmem [shape: f32[8,4], index: 5, kind: output, shape index: {}]
  %s6 = sld [smem:[#allocation0]]
  $region30: #{policy_forward.1} parent=0
    _
  %s8 = ssub.s32 1, %s6
  %s9 = scalar_select 0, %s8, %s6
  // Predicated region
  $region2: #{policy_forward.1} parent=0 // pred_check
    _
  $region3: #{policy_forward.1} parent=0 // pred_check_branch
    %11 = sbr.rel (0) target = $region5
  $region4: #{policy_forward.1} parent=0 // pred_region
    _
  $region5: #{policy_forward.1} parent=0 // pred_fallthru
    _
  // Predicated region
  $region6: #{policy_forward.1} parent=0 // pred_check
    _
  $region7: #{policy_forward.1} parent=0 // pred_check_branch
    %13 = sbr.rel (0) target = $region9
  $region8: #{policy_forward.1} parent=0 // pred_region
    _
  $region9: #{policy_forward.1} parent=0 // pred_fallthru
    _
  // Predicated region
  $region10: #{policy_forward.1} parent=0 // pred_check
    _
  $region11: #{policy_forward.1} parent=0 // pred_check_branch
    %15 = sbr.rel (0) target = $region13
  $region12: #{policy_forward.1} parent=0 // pred_region
    _
  $region13: #{policy_forward.1} parent=0 // pred_fallthru
    _
  // Predicated region
  $region14: #{policy_forward.1} parent=0 // pred_check
    _
  $region15: #{policy_forward.1} parent=0 // pred_check_branch
    %17 = sbr.rel (0) target = $region17
  $region16: #{policy_forward.1} parent=0 // pred_region
    _
  $region17: #{policy_forward.1} parent=0 // pred_fallthru
    _
  // Predicated region
  $region18: #{policy_forward.1} parent=0 // pred_check
    _
  $region19: #{policy_forward.1} parent=0 // pred_check_branch
    %19 = sbr.rel (0) target = $region21
  $region20: #{policy_forward.1} parent=0 // pred_region
    _
  $region21: #{policy_forward.1} parent=0 // pred_fallthru
    _
  %v20 = vld [vmem:[%s0] sm:$0xff]
  %v21 = vld [vmem:[%s1] sm:$0xff]
  %v22 = vld [vmem:[%s1 + $0x8] sm:$0xff]
  %v23 = vld [vmem:[%s2] sm:$0x1]
  %v25 = vlaneseq
  %v26 = vshrl.u32 %v25, 7
  %v27 = vsub.s32 0, %v26
  %v28 = vrot.slane %v23, %v27
  %vm30 = vcmask 130048
  %v32 = vsel %vm30, %v20, 0
  %34 = vmatprep.subr.mxu0 0.0
  %35 = vmatpush1.msra.mxu0 %v21
  %36 = vmatprep.subr.mxu0 0.0
  %37 = vmatpush1.msra.mxu0 %v22
  %38 = vmatprep.subr.mxu0 0.0
  %39 = vmatpush1.msra.mxu0 0.0
  %40 = vmatprep.subr.mxu0 0.0
  %41 = vmatpush1.msra.mxu0 0.0
  %42 = vmatprep.subr.mxu0 0.0
  %43 = vmatpush1.msra.mxu0 0.0
  %44 = vmatprep.subr.mxu0 0.0
  %45 = vmatpush1.msra.mxu0 0.0
  %46 = vmatprep.subr.mxu0 0.0
  %47 = vmatpush1.msra.mxu0 0.0
  %48 = vmatprep.subr.mxu0 0.0
  %49 = vmatpush1.msra.mxu0 0.0
  %50 = vmatprep.subr.mxu0 0.0
  %51 = vmatpush1.msra.mxu0 0.0
  %52 = vmatprep.subr.mxu0 0.0
  %53 = vmatpush1.msra.mxu0 0.0
  %54 = vmatprep.subr.mxu0 0.0
  %55 = vmatpush1.msra.mxu0 0.0
  %56 = vmatprep.subr.mxu0 0.0
  %57 = vmatpush1.msra.mxu0 0.0
  %58 = vmatprep.subr.mxu0 0.0
  %59 = vmatpush1.msra.mxu0 0.0
  %60 = vmatprep.subr.mxu0 0.0
  %61 = vmatpush1.msra.mxu0 0.0
  %62 = vmatprep.subr.mxu0 0.0
  %63 = vmatpush1.msra.mxu0 0.0
  %64 = vmatprep.subr.mxu0 0.0
  %65 = vmatpush1.msra.mxu0 0.0
  %66 = vmatprep.subr.mxu0 0.0
  %67 = vmatpush1.msra.mxu0 0.0
  %68 = vmatprep.subr.mxu0 0.0
  %69 = vmatpush1.msra.mxu0 0.0
  %70 = vmatprep.subr.mxu0 0.0
  %71 = vmatpush1.msra.mxu0 0.0
  %72 = vmatprep.subr.mxu0 0.0
  %73 = vmatpush1.msra.mxu0 0.0
  %74 = vmatprep.subr.mxu0 0.0
  %75 = vmatpush1.msra.mxu0 0.0
  %76 = vmatprep.subr.mxu0 0.0
  %77 = vmatpush1.msra.mxu0 0.0
  %78 = vmatprep.subr.mxu0 0.0
  %79 = vmatpush1.msra.mxu0 0.0
  %80 = vmatprep.subr.mxu0 0.0
  %81 = vmatpush1.msra.mxu0 0.0
  %82 = vmatprep.subr.mxu0 0.0
  %83 = vmatpush1.msra.mxu0 0.0
  %84 = vmatprep.subr.mxu0 0.0
  %85 = vmatpush1.msra.mxu0 0.0
  %86 = vmatprep.subr.mxu0 0.0
  %87 = vmatpush1.msra.mxu0 0.0
  %88 = vmatprep.subr.mxu0 0.0
  %89 = vmatpush1.msra.mxu0 0.0
  %90 = vmatprep.subr.mxu0 0.0
  %91 = vmatpush1.msra.mxu0 0.0
  %92 = vmatprep.subr.mxu0 0.0
  %93 = vmatpush1.msra.mxu0 0.0
  %94 = vmatprep.subr.mxu0 0.0
  %95 = vmatpush1.msra.mxu0 0.0
  %96 = vmatprep.subr.mxu0 0.0
  %97 = vmatpush1.msra.mxu0 0.0
  %98 = vmatprep.mubr.f32.mxu0 0.0
  %99 = vmatmul.mubr.f32.gmra.mrb[0].mxu0 %v32
  %v100 = vpop.f32.mrb[0].mxu0
  %v101 = vadd.f32 %v28, %v100
  %v102 = vpop.f32.mrb[0].mxu0
  %103 = vdwg.mxu0
  %v104 = vmul.f32 %v101, 0.01
  %v105 = vmax.f32 %v101, %v104
  %v106 = vld [vmem:[%s3] sm:$0xff]
  %v107 = vld [vmem:[%s3 + $0x8] sm:$0xff]
  %v108 = vld [vmem:[%s3 + $0x10] sm:$0xff]
  %v109 = vld [vmem:[%s3 + $0x18] sm:$0xff]
  %v110 = vld [vmem:[%s3 + $0x20] sm:$0xff]
  %v111 = vld [vmem:[%s3 + $0x28] sm:$0xff]
  %v112 = vld [vmem:[%s3 + $0x30] sm:$0xff]
  %v113 = vld [vmem:[%s3 + $0x38] sm:$0xff]
  %v114 = vld [vmem:[%s4] sm:$0x1]
  %v116 = vlaneseq
  %v117 = vshrl.u32 %v116, 7
  %v118 = vsub.s32 0, %v117
  %v119 = vrot.slane %v114, %v118
  %vm121 = vcmask 523264
  %v123 = vsel %vm121, %v105, 0
  %125 = vmatprep.subr.mxu0 0.0
  %126 = vmatpush1.msra.mxu0 %v106
  %127 = vmatprep.subr.mxu0 0.0
  %128 = vmatpush1.msra.mxu0 %v107
  %129 = vmatprep.subr.mxu0 0.0
  %130 = vmatpush1.msra.mxu0 %v108
  %131 = vmatprep.subr.mxu0 0.0
  %132 = vmatpush1.msra.mxu0 %v109
  %133 = vmatprep.subr.mxu0 0.0
  %134 = vmatpush1.msra.mxu0 %v110
  %135 = vmatprep.subr.mxu0 0.0
  %136 = vmatpush1.msra.mxu0 %v111
  %137 = vmatprep.subr.mxu0 0.0
  %138 = vmatpush1.msra.mxu0 %v112
  %139 = vmatprep.subr.mxu0 0.0
  %140 = vmatpush1.msra.mxu0 %v113
  %141 = vmatprep.subr.mxu0 0.0
  %142 = vmatpush1.msra.mxu0 0.0
  %143 = vmatprep.subr.mxu0 0.0
  %144 = vmatpush1.msra.mxu0 0.0
  %145 = vmatprep.subr.mxu0 0.0
  %146 = vmatpush1.msra.mxu0 0.0
  %147 = vmatprep.subr.mxu0 0.0
  %148 = vmatpush1.msra.mxu0 0.0
  %149 = vmatprep.subr.mxu0 0.0
  %150 = vmatpush1.msra.mxu0 0.0
  %151 = vmatprep.subr.mxu0 0.0
  %152 = vmatpush1.msra.mxu0 0.0
  %153 = vmatprep.subr.mxu0 0.0
  %154 = vmatpush1.msra.mxu0 0.0
  %155 = vmatprep.subr.mxu0 0.0
  %156 = vmatpush1.msra.mxu0 0.0
  %157 = vmatprep.subr.mxu0 0.0
  %158 = vmatpush1.msra.mxu0 0.0
  %159 = vmatprep.subr.mxu0 0.0
  %160 = vmatpush1.msra.mxu0 0.0
  %161 = vmatprep.subr.mxu0 0.0
  %162 = vmatpush1.msra.mxu0 0.0
  %163 = vmatprep.subr.mxu0 0.0
  %164 = vmatpush1.msra.mxu0 0.0
  %165 = vmatprep.subr.mxu0 0.0
  %166 = vmatpush1.msra.mxu0 0.0
  %167 = vmatprep.subr.mxu0 0.0
  %168 = vmatpush1.msra.mxu0 0.0
  %169 = vmatprep.subr.mxu0 0.0
  %170 = vmatpush1.msra.mxu0 0.0
  %171 = vmatprep.subr.mxu0 0.0
  %172 = vmatpush1.msra.mxu0 0.0
  %173 = vmatprep.subr.mxu0 0.0
  %174 = vmatpush1.msra.mxu0 0.0
  %175 = vmatprep.subr.mxu0 0.0
  %176 = vmatpush1.msra.mxu0 0.0
  %177 = vmatprep.subr.mxu0 0.0
  %178 = vmatpush1.msra.mxu0 0.0
  %179 = vmatprep.subr.mxu0 0.0
  %180 = vmatpush1.msra.mxu0 0.0
  %181 = vmatprep.subr.mxu0 0.0
  %182 = vmatpush1.msra.mxu0 0.0
  %183 = vmatprep.subr.mxu0 0.0
  %184 = vmatpush1.msra.mxu0 0.0
  %185 = vmatprep.subr.mxu0 0.0
  %186 = vmatpush1.msra.mxu0 0.0
  %187 = vmatprep.subr.mxu0 0.0
  %188 = vmatpush1.msra.mxu0 0.0
  %189 = vmatprep.mubr.f32.mxu0 0.0
  %190 = vmatmul.mubr.f32.gmra.mrb[0].mxu0 %v123
  %v191 = vpop.f32.mrb[0].mxu0
  %v192 = vadd.f32 %v119, %v191
  %v193 = vpop.f32.mrb[0].mxu0
  %194 = vdwg.mxu0
  %v195 = vmul.f32 %v192, 0.035
  %v196 = vtanh.pop %v195
  %vm197 = vcmask 31744
  %198 = vst.msk [vmem:[%s5] sm:$0xff] %vm197, %v196
  // Predicated region
  $region22: #{policy_forward.1} parent=0 // pred_check
    _
  $region23: #{policy_forward.1} parent=0 // pred_check_branch
    %200 = sbr.rel (0) target = $region25
  $region24: #{policy_forward.1} parent=0 // pred_region
    _
  $region25: #{policy_forward.1} parent=0 // pred_fallthru
    _
  // Predicated region
  $region26: #{policy_forward.1} parent=0 // pred_check
    _
  $region27: #{policy_forward.1} parent=0 // pred_check_branch
    %202 = sbr.rel (0) target = $region29
  $region28: #{policy_forward.1} parent=0 // pred_region
    _
  $region29: #{policy_forward.1} parent=0 // pred_fallthru
    _

</llo_original>
